<compile_context>
chip_gen: v6e
topology: v6e:2x2x1
jax: 0.10.0
libtpu: 0.0.40
codegen_flags: <defaults>
</compile_context>

<pallas_src>
import math

import jax
import jax.numpy as jnp
from jax import lax
from jax.experimental import pallas as pl
from jax.experimental.pallas import tpu as pltpu


# ---------------------------------------------------------------------------
# Helpers
# ---------------------------------------------------------------------------
def _round_up(x, m):
    return ((x + m - 1) // m) * m


def _sublane_pack(dtype):
    # Native sublane packing: f32 -> 8 rows/vreg, bf16 -> 16, int8/fp8 -> 32.
    return max(1, 4 // jnp.dtype(dtype).itemsize) * 8


def _vmem_limit_bytes():
    # 64 MiB on the 128 MiB-VMEM parts (v5e/v6e); 32 MiB on v7x (64 MiB VMEM).
    try:
        cap = pltpu.get_tpu_info().vmem_capacity_bytes
    except Exception:
        cap = 64 * 1024 * 1024
    return int(min(cap // 2, 64 * 1024 * 1024))


def _largest_tile(dim_p, target):
    """Largest multiple-of-128 divisor of dim_p (itself a 128-multiple) <= target."""
    units = dim_p // 128
    best = 1
    for d in range(1, units + 1):
        if units % d == 0 and d * 128 <= target:
            best = d
    return best * 128


def _choose_row_tile(m_rows, batch, pack, target_rows=256):
    """Row tile: a multiple of lcm(batch, pack) so the locked mask tiles exactly,
    roughly target_rows big, and >=2 grid steps along the parallel axis when
    possible (v7x megacore sharding)."""
    base = batch * pack // math.gcd(batch, pack)          # lcm(batch, pack)
    tm = (max(target_rows, base) // base) * base
    if tm >= m_rows:
        if m_rows > base:
            tm = _round_up(-(-m_rows // 2), base)          # cdiv(m, 2) -> 2 blocks
        else:
            tm = base
    return int(tm)


# ---------------------------------------------------------------------------
# Fused LockedDropout + matmul (+bias) Pallas kernel  (the main kernel)
# ---------------------------------------------------------------------------
def _dropout_matmul_kernel(x_ref, m_ref, wt_ref, b_ref, o_ref, acc_ref):
    # Locked-dropout multiply fused as a (free) VPU prologue under the MXU
    # matmul; f32 VMEM accumulator; bias added + store at the last K step.
    @pl.when(pl.program_id(2) == 0)
    def _():
        acc_ref[...] = jnp.zeros_like(acc_ref)

    xm = x_ref[...] * m_ref[...]
    acc_ref[...] += jnp.dot(xm, wt_ref[...], preferred_element_type=jnp.float32)

    @pl.when(pl.program_id(2) == pl.num_programs(2) - 1)
    def _():
        o_ref[...] = (acc_ref[...] + b_ref[...]).astype(o_ref.dtype)


def fused_locked_dropout_matmul(x, mask, w, b, *, compute_dtype=jnp.bfloat16,
                                out_dtype=jnp.float32,
                                tm_target=256, tn_target=256, tk_target=512):
    """out[t, b] = (mask[b] * x[t, b]) @ w.T + bias, as one Pallas MXU matmul.

    x: (T, B, K) activations; mask: (B, K) locked dropout mask (already scaled
    by 1/keep, ones when dropout is off); w: (N, K) PyTorch Linear/LSTM layout;
    b: (N,).  The mask multiply is the kernel prologue, so LockedDropout adds
    zero extra HBM traffic and no extra kernel launch.
    """
    T, B, K = x.shape
    N = w.shape[0]
    M = T * B

    pack = _sublane_pack(compute_dtype)
    tm = _choose_row_tile(M, B, pack, tm_target)
    Mp = _round_up(M, tm)
    Kp = _round_up(K, 128)            # lane-dense LHS / aligned RHS sublanes
    Np = _round_up(N, 128)            # lane-dense output -> unmasked vst
    tk = _largest_tile(Kp, tk_target)
    tn = _largest_tile(Np, tn_target)

    x2 = x.reshape(M, K).astype(compute_dtype)
    if (Mp, Kp) != (M, K):
        x2 = jnp.pad(x2, ((0, Mp - M), (0, Kp - K)))

    # tm % B == 0, so every row block sees the same locked-mask pattern: a
    # single (tm, Kp) tile with a constant row index_map stays resident in VMEM.
    m2 = jnp.tile(mask.astype(compute_dtype), (tm // B, 1))
    if Kp != K:
        m2 = jnp.pad(m2, ((0, 0), (0, Kp - K)))

    wt = w.T.astype(compute_dtype)                         # pre-transpose once
    if (Kp, Np) != (K, N):
        wt = jnp.pad(wt, ((0, Kp - K), (0, Np - N)))

    b2 = b.reshape(1, N).astype(jnp.float32)
    if Np != N:
        b2 = jnp.pad(b2, ((0, 0), (0, Np - N)))

    grid = (Mp // tm, Np // tn, Kp // tk)
    out = pl.pallas_call(
        _dropout_matmul_kernel,
        out_shape=jax.ShapeDtypeStruct((Mp, Np), out_dtype),
        grid_spec=pltpu.PrefetchScalarGridSpec(
            num_scalar_prefetch=0,
            grid=grid,
            in_specs=[
                pl.BlockSpec((tm, tk), lambda i, j, k: (i, k)),   # x row tiles
                pl.BlockSpec((tm, tk), lambda i, j, k: (0, k)),   # locked mask
                pl.BlockSpec((tk, tn), lambda i, j, k: (k, j)),   # w^T
                pl.BlockSpec((1, tn), lambda i, j, k: (0, j)),    # bias
            ],
            out_specs=pl.BlockSpec((tm, tn), lambda i, j, k: (i, j)),
            scratch_shapes=[pltpu.VMEM((tm, tn), jnp.float32)],
        ),
        compiler_params=pltpu.CompilerParams(
            dimension_semantics=("parallel", "parallel", "arbitrary"),
            vmem_limit_bytes=_vmem_limit_bytes(),
        ),
    )(x2, m2, wt, b2)
    return out[:M, :N].reshape(T, B, N)


def _ref_locked_dropout_matmul(x, mask, w, b, *, compute_dtype=jnp.bfloat16,
                               out_dtype=jnp.float32):
    """Pure-JAX reference with identical casting (for correctness checks)."""
    T, B, K = x.shape
    xm = x.astype(compute_dtype) * mask.astype(compute_dtype)[None]
    out = jnp.dot(xm.reshape(T * B, K), w.T.astype(compute_dtype),
                  preferred_element_type=jnp.float32) + b.astype(jnp.float32)[None]
    return out.reshape(T, B, w.shape[0]).astype(out_dtype)


# ---------------------------------------------------------------------------
# Standalone LockedDropout kernel (kept for the module itself; not on the
# fused forward path anymore).
# ---------------------------------------------------------------------------
def _locked_dropout_kernel(x_ref, m_ref, o_ref):
    o_ref[...] = (x_ref[...] * m_ref[...]).astype(o_ref.dtype)


def _choose_dropout_rows(n_rows, n_cols, itemsize):
    """~4-8 MiB per buffer (generation-dependent), multiple of the dtype's
    sublane pack, and >=2 grid steps when possible (v7x megacore)."""
    try:
        vmem = pltpu.get_tpu_info().vmem_capacity_bytes
    except Exception:
        vmem = 64 * 1024 * 1024
    target = (8 << 20) if vmem > (64 << 20) else (4 << 20)
    pack = max(1, 4 // itemsize) * 8
    rows = max(pack, (target // max(1, n_cols * itemsize)) // pack * pack)
    if rows >= n_rows:
        if n_rows > pack:
            rows = _round_up(-(-n_rows // 2), pack)
        else:
            rows = n_rows
    return int(rows)


def locked_dropout(x, dropout, key, training=True):
    """Pallas LockedDropout.forward(x, dropout); x: (T, B, H), mask locked over T."""
    if (not training) or dropout == 0.0:
        return x
    keep = 1.0 - float(dropout)
    T, B, H = x.shape
    N = B * H
    # Mask in the x dtype when x is sub-32-bit (keeps packed bf16 VALU / vst);
    # f32 otherwise.  1/keep computed in f32 first.
    mask_dtype = x.dtype if jnp.dtype(x.dtype).itemsize < 4 else jnp.float32
    mask = (jax.random.bernoulli(key, p=keep, shape=(1, N)).astype(jnp.float32)
            / keep).astype(mask_dtype)

    x2 = x.reshape(T, N)                                   # lane-dense 2D layout
    tile_t = _choose_dropout_rows(T, N, x.dtype.itemsize)
    out = pl.pallas_call(
        _locked_dropout_kernel,
        out_shape=jax.ShapeDtypeStruct((T, N), x.dtype),
        grid=(pl.cdiv(T, tile_t),),
        in_specs=[
            pl.BlockSpec((tile_t, N), lambda i: (i, 0)),   # streamed x tiles
            pl.BlockSpec((1, N), lambda i: (0, 0)),        # mask resident in VMEM
        ],
        out_specs=pl.BlockSpec((tile_t, N), lambda i: (i, 0)),
        compiler_params=pltpu.CompilerParams(
            dimension_semantics=("parallel",),
            vmem_limit_bytes=_vmem_limit_bytes(),
        ),
        # TODO(synk): input_output_aliases={0: 0} when the caller donates x; an
        # in-kernel pltpu.prng_* mask draw would also drop the mask HBM array.
    )(x2, mask)
    return out.reshape(T, B, H)


# ---------------------------------------------------------------------------
# Remaining pieces of LanguageModel.forward in plain JAX.
# ---------------------------------------------------------------------------
def embedded_dropout(embed_w, words, dropout, key, training=True):
    # TODO(synk): the embedding-row gather has no clean rectangular BlockSpec
    # form at this scale; left to XLA (jnp.take).
    if training and dropout > 0.0:
        keep = 1.0 - dropout
        row_mask = (jax.random.bernoulli(key, p=keep, shape=(embed_w.shape[0], 1))
                    .astype(embed_w.dtype) / keep)
        w = embed_w * row_mask
    else:
        w = embed_w
    return jnp.take(w, words, axis=0)


def weight_drop(w_hh, dropout, key, training=True):
    # WeightDrop._setweights: F.dropout(ones, p) * (1 - p) == UNscaled
    # Bernoulli(1-p) mask (the 1/(1-p) scale cancels) -- matches the reference.
    if training and dropout > 0.0:
        m = jax.random.bernoulli(key, p=1.0 - dropout, shape=w_hh.shape)
        return w_hh * m.astype(w_hh.dtype)
    return w_hh


def _locked_mask(key, dropout, shape, training):
    if (not training) or dropout == 0.0:
        return jnp.ones(shape, jnp.float32)
    keep = 1.0 - float(dropout)
    return jax.random.bernoulli(key, p=keep, shape=shape).astype(jnp.float32) / keep


def _lstm_recurrence(gates_x, w_hh, compute_dtype):
    # TODO(synk): the step-wise LSTM recurrence is inherently sequential and
    # stays in lax.scan; only the small h @ w_hh^T matmul remains per step
    # (input projection + locked dropout are hoisted into one Pallas kernel).
    T, B, H4 = gates_x.shape
    H = H4 // 4
    w_hh_t = w_hh.T.astype(compute_dtype)                  # pre-transpose once

    def step(carry, gx):
        h, c = carry
        gates = gx + jnp.dot(h.astype(compute_dtype), w_hh_t,
                             preferred_element_type=jnp.float32)
        i, f, g, o = jnp.split(gates, 4, axis=-1)          # PyTorch order i,f,g,o
        i = jax.nn.sigmoid(i)
        f = jax.nn.sigmoid(f)
        g = jnp.tanh(g)
        o = jax.nn.sigmoid(o)
        c = f * c + i * g
        h = o * jnp.tanh(c)
        return (h, c), h

    h0 = jnp.zeros((B, H), jnp.float32)
    c0 = jnp.zeros((B, H), jnp.float32)
    _, ys = lax.scan(step, (h0, c0), gates_x)
    return ys


def init_language_model(key, vocab_size, embedding_dim, hidden_dim):
    ks = jax.random.split(key, 14)

    def uni(k, shape, scale):
        return jax.random.uniform(k, shape, jnp.float32, -scale, scale)

    emb_w = uni(ks[0], (vocab_size, embedding_dim), 0.1)
    dims = [(embedding_dim, hidden_dim),
            (hidden_dim, hidden_dim),
            (hidden_dim, embedding_dim)]
    lstms = []
    for i, (din, dh) in enumerate(dims):
        k1, k2, k3, k4 = ks[1 + 4 * i:5 + 4 * i]
        s = 1.0 / math.sqrt(dh)
        lstms.append(dict(w_ih=uni(k1, (4 * dh, din), s),
                          w_hh=uni(k2, (4 * dh, dh), s),
                          b_ih=uni(k3, (4 * dh,), s),
                          b_hh=uni(k4, (4 * dh,), s)))
    fc_b = uni(ks[-1], (vocab_size,), 1.0 / math.sqrt(embedding_dim))
    return dict(emb_w=emb_w, lstms=lstms, fc_b=fc_b)       # fc.weight tied to emb_w


def language_model_forward(params, src, key, *, num_layers=3,
                           dropoute=0.2, dropouti=0.2, dropouth=0.2,
                           dropouto=0.2, weight_drop_p=0.2, training=True,
                           use_pallas=True, compute_dtype=jnp.bfloat16):
    lstms = params["lstms"]
    n = len(lstms)
    B = src.shape[1]
    keys = jax.random.split(key, 2 + 2 * n)
    k_embed, k_out = keys[0], keys[1]
    k_wd = keys[2:2 + n]
    k_ld = keys[2 + n:2 + 2 * n]

    mm = fused_locked_dropout_matmul if use_pallas else _ref_locked_dropout_matmul

    h = embedded_dropout(params["emb_w"], src,
                         dropoute if training else 0.0, k_embed, training)
    for l, lp in enumerate(lstms):
        # Layer-l input dropout == reference's lockdrop on the previous output:
        # dropouti before layer 0, dropouth after layers l-1 != num_layers-1.
        if l == 0:
            p = dropouti
        else:
            p = dropouth if (l - 1) != num_layers - 1 else 0.0
        mask = _locked_mask(k_ld[l], p, (B, h.shape[-1]), training)
        w_hh = weight_drop(lp["w_hh"], weight_drop_p, k_wd[l], training)
        # Hoisted input projection: one fused (mask*x) @ w_ih^T + (b_ih + b_hh)
        # MXU matmul over all T*B tokens; only h @ w_hh^T stays in the scan.
        gates_x = mm(h, mask, lp["w_ih"], lp["b_ih"] + lp["b_hh"],
                     compute_dtype=compute_dtype)
        h = _lstm_recurrence(gates_x, w_hh, compute_dtype)
    # Tied decoder (fc.weight = embedding.weight) with dropouto fused in.
    mask_o = _locked_mask(k_out, dropouto, (B, h.shape[-1]), training)
    logits = mm(h, mask_o, params["emb_w"], params["fc_b"],
                compute_dtype=compute_dtype)
    return logits


# ---------------------------------------------------------------------------
# Demo / sanity checks
# ---------------------------------------------------------------------------
if __name__ == "__main__":
    root = jax.random.PRNGKey(0)
    k_param, k_src, k_fwd, k_mask, k_x, k_w, k_b, k_m2 = jax.random.split(root, 8)

    vocab_size, embedding_dim, hidden_dim, num_layers = 64, 32, 48, 3
    T, B = 8, 4

    # --- 1. fused locked-dropout + matmul kernel vs pure-JAX reference -----
    K, N = embedding_dim, 4 * hidden_dim
    x = jax.random.normal(k_x, (T, B, K), jnp.float32)
    w = jax.random.normal(k_w, (N, K), jnp.float32) * 0.1
    b = jax.random.normal(k_b, (N,), jnp.float32) * 0.1
    keep = 0.75
    mask = jax.random.bernoulli(k_m2, p=keep, shape=(B, K)).astype(jnp.float32) / keep

    out = jax.block_until_ready(fused_locked_dropout_matmul(x, mask, w, b))
    ref = _ref_locked_dropout_matmul(x, mask, w, b)
    assert out.shape == (T, B, N)
    assert jnp.allclose(out, ref, rtol=5e-3, atol=5e-3), "fused dropout-matmul mismatch"

    # --- 2. standalone LockedDropout kernel --------------------------------
    dropout = 0.5
    keep2 = 1.0 - dropout
    xd = jax.random.normal(k_x, (T, B, hidden_dim), jnp.float32)
    y = jax.block_until_ready(locked_dropout(xd, dropout, k_mask, training=True))
    ref_mask = (jax.random.bernoulli(k_mask, p=keep2, shape=(1, B * hidden_dim))
                .astype(jnp.float32) / keep2).reshape(1, B, hidden_dim)
    assert jnp.allclose(y, xd * ref_mask, atol=1e-6), "locked dropout mismatch"
    assert bool(jnp.all(locked_dropout(xd, dropout, k_mask, training=False) == xd))
    assert bool(jnp.all(locked_dropout(xd, 0.0, k_mask, training=True) == xd))

    # --- 3. full LanguageModel forward: Pallas path vs pure-JAX reference --
    params = init_language_model(k_param, vocab_size, embedding_dim, hidden_dim)
    src = jax.random.randint(k_src, (T, B), 0, vocab_size, dtype=jnp.int32)

    logits = jax.block_until_ready(
        language_model_forward(params, src, k_fwd, num_layers=num_layers,
                               training=True, use_pallas=True))
    logits_ref = language_model_forward(params, src, k_fwd, num_layers=num_layers,
                                        training=True, use_pallas=False)
    assert logits.shape == (T, B, vocab_size)
    assert bool(jnp.all(jnp.isfinite(logits)))
    assert jnp.allclose(logits, logits_ref, rtol=5e-3, atol=5e-3), "train fwd mismatch"

    logits_eval = jax.block_until_ready(
        language_model_forward(params, src, k_fwd, num_layers=num_layers,
                               training=False, use_pallas=True))
    logits_eval_ref = language_model_forward(params, src, k_fwd, num_layers=num_layers,
                                             training=False, use_pallas=False)
    assert jnp.allclose(logits_eval, logits_eval_ref, rtol=5e-3, atol=5e-3), \
        "eval fwd mismatch"

    print("KERNEL_OK")
</pallas_src>

<mosaic_0001>
module attributes {stable_mosaic.version = 11 : i64} {
  func.func @_dropout_matmul_kernel(%arg0: i32, %arg1: i32, %arg2: i32, %arg3: memref<16x128xbf16, #tpu.memory_space<vmem>>, %arg4: memref<16x128xbf16, #tpu.memory_space<vmem>>, %arg5: memref<128x256xbf16, #tpu.memory_space<vmem>>, %arg6: memref<1x256xf32, #tpu.memory_space<vmem>>, %arg7: memref<16x256xf32, #tpu.memory_space<vmem>>, %arg8: memref<16x256xf32, #tpu.memory_space<vmem>>) attributes {dimension_semantics = [#tpu.dimension_semantics<parallel>, #tpu.dimension_semantics<parallel>, #tpu.dimension_semantics<arbitrary>], iteration_bounds = array<i64: 2, 1, 1>, scalar_prefetch = 0 : i64, scratch_operands = 1 : i64, tpu.core_type = #tpu.core_type<tc>, window_params = [{transform_indices = @transform_0, window_bounds = array<i64: 16, 128>}, {transform_indices = @transform_1, window_bounds = array<i64: 16, 128>}, {transform_indices = @transform_2, window_bounds = array<i64: 128, 256>}, {transform_indices = @transform_3, window_bounds = array<i64: 1, 256>}, {transform_indices = @transform_4, window_bounds = array<i64: 16, 256>}]} {
    %c0_i32 = arith.constant 0 : i32
    %0 = arith.cmpi eq, %arg2, %c0_i32 : i32
    %1 = arith.extui %0 : i1 to i32
    %c0_i32_0 = arith.constant 0 : i32
    %2 = arith.cmpi ne, %1, %c0_i32_0 : i32
    scf.if %2 {
      %cst_12 = arith.constant 0.000000e+00 : f32
      %14 = vector.broadcast %cst_12 : f32 to vector<16x256xf32>
      %c0_13 = arith.constant 0 : index
      %c0_14 = arith.constant 0 : index
      %15 = vector.load %arg8[%c0_13, %c0_14] : memref<16x256xf32, #tpu.memory_space<vmem>>, vector<16x256xf32>
      tpu.vector_store %arg8[%c0_13, %c0_14], %14 {strides = array<i32>} : memref<16x256xf32, #tpu.memory_space<vmem>>, vector<16x256xf32>,
    } else {
    }
    %c0 = arith.constant 0 : index
    %c0_1 = arith.constant 0 : index
    %3 = vector.load %arg3[%c0, %c0_1] : memref<16x128xbf16, #tpu.memory_space<vmem>>, vector<16x128xbf16>
    %c0_2 = arith.constant 0 : index
    %c0_3 = arith.constant 0 : index
    %4 = vector.load %arg4[%c0_2, %c0_3] : memref<16x128xbf16, #tpu.memory_space<vmem>>, vector<16x128xbf16>
    %5 = arith.mulf %3, %4 : vector<16x128xbf16>
    %c0_4 = arith.constant 0 : index
    %c0_5 = arith.constant 0 : index
    %6 = vector.load %arg8[%c0_4, %c0_5] : memref<16x256xf32, #tpu.memory_space<vmem>>, vector<16x256xf32>
    %c0_6 = arith.constant 0 : index
    %c0_7 = arith.constant 0 : index
    %7 = vector.load %arg5[%c0_6, %c0_7] : memref<128x256xbf16, #tpu.memory_space<vmem>>, vector<128x256xbf16>
    %cst = arith.constant dense<0.000000e+00> : vector<16x256xf32>
    %8 = tpu.matmul %5, %7, %cst {dimension_numbers = #tpu.dot_dimension_numbers<[1], [0], [0], [1], [0, 0, 1, 1], [], []>} : vector<16x128xbf16>, vector<128x256xbf16>, vector<16x256xf32> -> vector<16x256xf32>
    %9 = arith.addf %6, %8 : vector<16x256xf32>
    %c0_8 = arith.constant 0 : index
    %c0_9 = arith.constant 0 : index
    %10 = vector.load %arg8[%c0_8, %c0_9] : memref<16x256xf32, #tpu.memory_space<vmem>>, vector<16x256xf32>
    tpu.vector_store %arg8[%c0_8, %c0_9], %9 {strides = array<i32>} : memref<16x256xf32, #tpu.memory_space<vmem>>, vector<16x256xf32>,
    %c0_i32_10 = arith.constant 0 : i32
    %11 = arith.cmpi eq, %arg2, %c0_i32_10 : i32
    %12 = arith.extui %11 : i1 to i32
    %c0_i32_11 = arith.constant 0 : i32
    %13 = arith.cmpi ne, %12, %c0_i32_11 : i32
    scf.if %13 {
      %c0_12 = arith.constant 0 : index
      %c0_13 = arith.constant 0 : index
      %14 = vector.load %arg8[%c0_12, %c0_13] : memref<16x256xf32, #tpu.memory_space<vmem>>, vector<16x256xf32>
      %c0_14 = arith.constant 0 : index
      %c0_15 = arith.constant 0 : index
      %15 = vector.load %arg6[%c0_14, %c0_15] : memref<1x256xf32, #tpu.memory_space<vmem>>, vector<1x256xf32>
      %16 = vector.broadcast %15 : vector<1x256xf32> to vector<16x256xf32>
      %17 = arith.addf %14, %16 : vector<16x256xf32>
      %c0_16 = arith.constant 0 : index
      %c0_17 = arith.constant 0 : index
      %18 = vector.load %arg7[%c0_16, %c0_17] : memref<16x256xf32, #tpu.memory_space<vmem>>, vector<16x256xf32>
      tpu.vector_store %arg7[%c0_16, %c0_17], %17 {strides = array<i32>} : memref<16x256xf32, #tpu.memory_space<vmem>>, vector<16x256xf32>,
    } else {
    }
    return
  }
  func.func @transform_0(%arg0: i32, %arg1: i32, %arg2: i32) -> (i32, i32) {
    %c0_i32 = arith.constant 0 : i32
    return %arg0, %arg2 : i32, i32
  }
  func.func @transform_1(%arg0: i32, %arg1: i32, %arg2: i32) -> (i32, i32) {
    %c0_i32 = arith.constant 0 : i32
    %c0_i32_0 = arith.constant 0 : i32
    return %c0_i32, %arg2 : i32, i32
  }
  func.func @transform_2(%arg0: i32, %arg1: i32, %arg2: i32) -> (i32, i32) {
    %c0_i32 = arith.constant 0 : i32
    return %arg2, %arg1 : i32, i32
  }
  func.func @transform_3(%arg0: i32, %arg1: i32, %arg2: i32) -> (i32, i32) {
    %c0_i32 = arith.constant 0 : i32
    %c0_i32_0 = arith.constant 0 : i32
    return %c0_i32, %arg1 : i32, i32
  }
  func.func @transform_4(%arg0: i32, %arg1: i32, %arg2: i32) -> (i32, i32) {
    %c0_i32 = arith.constant 0 : i32
    return %arg0, %arg1 : i32, i32
  }
}

</mosaic_0001>

<llo_original>
// kernel: tpu_custom_call.1
$region0: #{tpu_custom_call.1}
  #allocation0 [shape = 'u32[]', space=smem, size = 0x4, offset = 0x4, fixed_abs, tag = 'smem constant byte address 0x4 - core index']
  #allocation1 [shape = 'u32[144,128]{1,0:T(1,128)}', space=vmem, size = 0x12000, scoped, tag = 'internal scratch']
  #allocation2 [shape = 'f32[16,256]{1,0:T(8,128)}', space=vmem, size = 0x4000, scoped, tag = 'scratch operand']
  %s0 = inlined_call_operand.hbm [shape: bf16[32,128], index: 0, kind: input, shape index: {}]
  %s1 = inlined_call_operand.hbm [shape: bf16[16,128], index: 1, kind: input, shape index: {}]
  %s2 = inlined_call_operand.hbm [shape: bf16[128,256], index: 2, kind: input, shape index: {}]
  %s3 = inlined_call_operand.vmem [shape: f32[1,256], index: 3, kind: input, shape index: {}]
  %s4 = inlined_call_operand.hbm [shape: f32[32,256], index: 4, kind: output, shape index: {}]
  %s5 = sld [smem:[#allocation0]]
  $region69: #{tpu_custom_call.1} parent=0
    _
  %s7 = ssub.s32 1, %s5
  %s8 = scalar_select 0, %s7, %s5
  $region1: #{tpu_custom_call.1} parent=0
    #allocation3 [shape = 'u8[8192]{0}', space=vmem, size = 0x2000, scoped, tag = 'input window, operand 0']
    #allocation4 [shape = 's32[2]{0}', space=sflag, size = 0x8, scoped, tag = 'scoped memory for tpu_custom_call.1']
    #allocation5 [shape = 's32[2]{0}', space=sflag, size = 0x8, scoped, tag = 'scoped memory for tpu_custom_call.1']
    #allocation6 [shape = 'u8[4096]{0}', space=vmem, size = 0x1000, scoped, tag = 'input window, operand 1, single buffered']
    #allocation7 [shape = 's32[1]{0}', space=sflag, size = 0x4, scoped, tag = 'scoped memory for tpu_custom_call.1']
    #allocation8 [shape = 'u8[65536]{0}', space=vmem, size = 0x10000, scoped, tag = 'input window, operand 2, single buffered']
    #allocation9 [shape = 'u8[32768]{0}', space=vmem, size = 0x8000, scoped, tag = 'output window, operand 0']
    %9 = vsyncpa [#allocation4], 0
    %s10 = scalar_lea.sflag [#allocation4], 1
    %11 = vsyncpa %s10, 0
    %12 = vsyncpa [#allocation7], 0
    %13 = vsyncpa [#allocation5], 0
    %s14 = scalar_lea.sflag [#allocation5], 1
    %15 = vsyncpa %s14, 0
    loop: start=0, step=1, limit=4
    $region2: #{tpu_custom_call.1} parent=1 // loop_pre_header
      _
    $region3: #{tpu_custom_call.1} parent=1 // loop_header
      %s17 = sphi 0, %s21
      %p18 = scmp.ge.s32.totalorder %s17, 4
      %s24 = sphi 0, %s43
      %s25 = sphi 0, %s39
      %s26 = sphi 0, %s35
      %s27 = sphi 0, %s24
      %s28 = sphi 0, %s25
      %s29 = sphi 0, %s26
      %s30 = sphi 0, %s27
      %s31 = sphi 0, %s28
      %s32 = sphi 0, %s29
      %s48 = sphi 0, %s50
      %s51 = sphi 0, %s48
      %s52 = sphi 0, %s51
      %s68 = sphi 0, %s52
      %s74 = sphi 0, %s76
      %s77 = sphi 0, %s74
      %s78 = sphi 0, %s77
      %s94 = sphi 0, %s78
      %s102 = sphi 0, %s104
      %s105 = sphi 0, %s102
      %s106 = sphi 0, %s105
      %s122 = sphi 0, %s106
      %s128 = sphi 0, %s130
      %s131 = sphi 0, %s128
      %s132 = sphi 0, %s131
      %s148 = sphi 0, %s132
      %s156 = sphi 0, %s158
      %s159 = sphi 0, %s156
      %s160 = sphi 0, %s159
      %s176 = sphi 0, %s160
    $region4: #{tpu_custom_call.1} parent=1 // loop_header_branch
      %20 = sbr.rel (%p18) target = $region8
    $region5: #{tpu_custom_call.1} parent=1 // loop_body
      %s22 = ssub.s32 %s17, 1
      %s23 = ssub.s32 %s17, 2
      %s33 = sadd.s32 1, %s26
      %p34 = scmp.ge.s32.totalorder %s33, 1
      %s35 = scalar_select %p34, 0, %s33
      %s36 = sadd.s32 1, %s25
      %s37 = scalar_select %p34, %s36, %s25
      %p38 = scmp.ge.s32.totalorder %s37, 1
      %s39 = scalar_select %p38, 0, %s37
      %s40 = sadd.s32 1, %s24
      %s41 = scalar_select %p38, %s40, %s24
      %p42 = scmp.ge.s32.totalorder %s41, 2
      %s43 = scalar_select %p42, 0, %s41
      %s44 = ssub.s32 %s24, %s43
      %s45 = ssub.s32 %s26, %s35
      %s46 = sor.u32 %s44, %s45
      %p47 = scmp.eq.s32.totalorder %s46, 0
      %s49 = sadd.s32 %s48, 1
      %s50 = scalar_select %p47, %s48, %s49
      %p53 = pneg %p47
      %p54 = scmp.eq.s32.totalorder %s17, 1
      %p55 = por %p53, %p54
      %p56 = scmp.ne.s32.totalorder %s48, %s51
      %p57 = scmp.eq.s32.totalorder %s17, 0
      %p58 = por %p56, %p57
      %p59 = scmp.ne.s32.totalorder %s48, %s51
      %p60 = scmp.eq.s32.totalorder %s22, 1
      %p61 = por %p59, %p60
      %p62 = scmp.ne.s32.totalorder %s51, %s52
      %p63 = scmp.eq.s32.totalorder %s22, 0
      %p64 = por %p62, %p63
      %p65 = scmp.ne.s32.totalorder %s51, %s52
      %p66 = scmp.eq.s32.totalorder %s23, 1
      %p67 = por %p65, %p66
      %p69 = scmp.ne.s32.totalorder %s52, %s68
      %p70 = scmp.eq.s32.totalorder %s23, 0
      %p71 = por %p69, %p70
      %s72 = ssub.s32 %s26, %s35
      %p73 = scmp.eq.s32.totalorder %s72, 0
      %s75 = sadd.s32 %s74, 1
      %s76 = scalar_select %p73, %s74, %s75
      %p79 = pneg %p73
      %p80 = scmp.eq.s32.totalorder %s17, 1
      %p81 = por %p79, %p80
      %p82 = scmp.ne.s32.totalorder %s74, %s77
      %p83 = scmp.eq.s32.totalorder %s17, 0
      %p84 = por %p82, %p83
      %p85 = scmp.ne.s32.totalorder %s74, %s77
      %p86 = scmp.eq.s32.totalorder %s22, 1
      %p87 = por %p85, %p86
      %p88 = scmp.ne.s32.totalorder %s77, %s78
      %p89 = scmp.eq.s32.totalorder %s22, 0
      %p90 = por %p88, %p89
      %p91 = scmp.ne.s32.totalorder %s77, %s78
      %p92 = scmp.eq.s32.totalorder %s23, 1
      %p93 = por %p91, %p92
      %p95 = scmp.ne.s32.totalorder %s78, %s94
      %p96 = scmp.eq.s32.totalorder %s23, 0
      %p97 = por %p95, %p96
      %s98 = ssub.s32 %s26, %s35
      %s99 = ssub.s32 %s25, %s39
      %s100 = sor.u32 %s98, %s99
      %p101 = scmp.eq.s32.totalorder %s100, 0
      %s103 = sadd.s32 %s102, 1
      %s104 = scalar_select %p101, %s102, %s103
      %p107 = pneg %p101
      %p108 = scmp.eq.s32.totalorder %s17, 1
      %p109 = por %p107, %p108
      %p110 = scmp.ne.s32.totalorder %s102, %s105
      %p111 = scmp.eq.s32.totalorder %s17, 0
      %p112 = por %p110, %p111
      %p113 = scmp.ne.s32.totalorder %s102, %s105
      %p114 = scmp.eq.s32.totalorder %s22, 1
      %p115 = por %p113, %p114
      %p116 = scmp.ne.s32.totalorder %s105, %s106
      %p117 = scmp.eq.s32.totalorder %s22, 0
      %p118 = por %p116, %p117
      %p119 = scmp.ne.s32.totalorder %s105, %s106
      %p120 = scmp.eq.s32.totalorder %s23, 1
      %p121 = por %p119, %p120
      %p123 = scmp.ne.s32.totalorder %s106, %s122
      %p124 = scmp.eq.s32.totalorder %s23, 0
      %p125 = por %p123, %p124
      %s126 = ssub.s32 %s25, %s39
      %p127 = scmp.eq.s32.totalorder %s126, 0
      %s129 = sadd.s32 %s128, 1
      %s130 = scalar_select %p127, %s128, %s129
      %p133 = pneg %p127
      %p134 = scmp.eq.s32.totalorder %s17, 1
      %p135 = por %p133, %p134
      %p136 = scmp.ne.s32.totalorder %s128, %s131
      %p137 = scmp.eq.s32.totalorder %s17, 0
      %p138 = por %p136, %p137
      %p139 = scmp.ne.s32.totalorder %s128, %s131
      %p140 = scmp.eq.s32.totalorder %s22, 1
      %p141 = por %p139, %p140
      %p142 = scmp.ne.s32.totalorder %s131, %s132
      %p143 = scmp.eq.s32.totalorder %s22, 0
      %p144 = por %p142, %p143
      %p145 = scmp.ne.s32.totalorder %s131, %s132
      %p146 = scmp.eq.s32.totalorder %s23, 1
      %p147 = por %p145, %p146
      %p149 = scmp.ne.s32.totalorder %s132, %s148
      %p150 = scmp.eq.s32.totalorder %s23, 0
      %p151 = por %p149, %p150
      %s152 = ssub.s32 %s24, %s43
      %s153 = ssub.s32 %s25, %s39
      %s154 = sor.u32 %s152, %s153
      %p155 = scmp.eq.s32.totalorder %s154, 0
      %s157 = sadd.s32 %s156, 1
      %s158 = scalar_select %p155, %s156, %s157
      %p161 = pneg %p155
      %p162 = scmp.eq.s32.totalorder %s17, 1
      %p163 = por %p161, %p162
      %p164 = scmp.ne.s32.totalorder %s156, %s159
      %p165 = scmp.eq.s32.totalorder %s17, 0
      %p166 = por %p164, %p165
      %p167 = scmp.ne.s32.totalorder %s156, %s159
      %p168 = scmp.eq.s32.totalorder %s22, 1
      %p169 = por %p167, %p168
      %p170 = scmp.ne.s32.totalorder %s159, %s160
      %p171 = scmp.eq.s32.totalorder %s22, 0
      %p172 = por %p170, %p171
      %p173 = scmp.ne.s32.totalorder %s159, %s160
      %p174 = scmp.eq.s32.totalorder %s23, 1
      %p175 = por %p173, %p174
      %p177 = scmp.ne.s32.totalorder %s160, %s176
      %p178 = scmp.eq.s32.totalorder %s23, 0
      %p179 = por %p177, %p178
      %p180 = scmp.le.s32.totalorder 1, %s17
      %p181 = scmp.lt.s32.totalorder %s17, 3
      %p182 = pnand %p180, %p181
      %p183 = pneg %p182
      // Predicated region
      $region9: #{tpu_custom_call.1} parent=5 // pred_check
        _
      $region10: #{tpu_custom_call.1} parent=5 // pred_check_branch
        %185 = sbr.rel (%p182) target = $region12
      $region11: #{tpu_custom_call.1} parent=5 // pred_region
        %s186 = ssub.s32 %s17, 1
        // Predicated region
        $region13: #{tpu_custom_call.1} parent=11 // pred_check
          %p187 = pneg %p90
        $region14: #{tpu_custom_call.1} parent=11 // pred_check_branch
          %189 = sbr.rel (%p187) target = $region16
        $region15: #{tpu_custom_call.1} parent=11 // pred_region
          %s191 = ssub.s32 128, 128
          %192 = vsyncadd [#allocation7], %s191
          %s193 = smul.addr %s29, 64
          %s194 = scalar_lea.hbm %s1, %s193
          %s195 = sshll.u32 [#allocation6], 4
          %s196 = int_to_ptr.vmem [resolvable:$true] %s195
          %201 = dma.hbm_to_vmem [thread:$0]  %s194, 128, %s196, [#allocation7], 64, 64, 4
        $region16: #{tpu_custom_call.1} parent=11 // pred_fallthru
          _
        // Predicated region
        $region17: #{tpu_custom_call.1} parent=11 // pred_check
          %p202 = pneg %p118
        $region18: #{tpu_custom_call.1} parent=11 // pred_check_branch
          %204 = sbr.rel (%p202) target = $region20
        $region19: #{tpu_custom_call.1} parent=11 // pred_region
          %s205 = smul.u32 16, %s29
          %s206 = smul.u32 2, %s28
          %s208 = ssub.s32 2048, 2048
          %209 = vsyncadd [#allocation7], %s208
          %s210 = smul.addr %s205, 2
          %s211 = sadd.s32 %s206, %s210
          %s212 = smul.addr %s211, 64
          %s213 = scalar_lea.hbm %s2, %s212
          %s214 = sshll.u32 [#allocation8], 4
          %s215 = int_to_ptr.vmem [resolvable:$true] %s214
          %220 = dma.hbm_to_vmem [thread:$0]  %s213, 2048, %s215, [#allocation7], 128, 128, 8
        $region20: #{tpu_custom_call.1} parent=11 // pred_fallthru
          _
        // Predicated region
        $region21: #{tpu_custom_call.1} parent=11 // pred_check
          %p221 = pneg %p144
        $region22: #{tpu_custom_call.1} parent=11 // pred_check_branch
          %223 = sbr.rel (%p221) target = $region24
        $region23: #{tpu_custom_call.1} parent=11 // pred_region
          %s224 = smul.u32 2, %s28
          %p225 = scmp.lt.s32.totalorder %s224, 1
          %s226 = scalar_select %p225, %s224, 1
          %s227 = scalar_lea.vmem %s3, %s226
          %s228 = smul.u32 2, %s28
        $region24: #{tpu_custom_call.1} parent=11 // pred_fallthru
          _
      $region12: #{tpu_custom_call.1} parent=5 // pred_fallthru
        _
      %p229 = scmp.lt.s32.totalorder %s17, 2
      // Predicated region
      $region25: #{tpu_custom_call.1} parent=5 // pred_check
        %p230 = pneg %p229
      $region26: #{tpu_custom_call.1} parent=5 // pred_check_branch
        %232 = sbr.rel (%p230) target = $region28
      $region27: #{tpu_custom_call.1} parent=5 // pred_region
        // Predicated region
        $region29: #{tpu_custom_call.1} parent=27 // pred_check
          %p233 = pneg %p58
        $region30: #{tpu_custom_call.1} parent=27 // pred_check_branch
          %235 = sbr.rel (%p233) target = $region32
        $region31: #{tpu_custom_call.1} parent=27 // pred_region
          %s236 = sand.u32 %s48, 1
          %s237 = scalar_lea.sflag [#allocation4], %s236
          %s238 = sand.u32 %s48, 1
          %s239 = smul.addr %s238, 8
          %s240 = scalar_lea.vmem [#allocation3], %s239
          %s241 = smul.u32 2, %s24
          %s243 = ssub.s32 128, 128
          %244 = vsyncadd %s237, %s243
          %s245 = sadd.s32 %s26, %s241
          %s246 = smul.addr %s245, 64
          %s247 = scalar_lea.hbm %s0, %s246
          %s248 = sshll.u32 %s240, 4
          %s249 = int_to_ptr.vmem [resolvable:$true] %s248
          %254 = dma.hbm_to_vmem [thread:$0]  %s247, 128, %s249, %s237, 64, 64, 4
        $region32: #{tpu_custom_call.1} parent=27 // pred_fallthru
          _
      $region28: #{tpu_custom_call.1} parent=5 // pred_fallthru
        _
      %p255 = scmp.le.s32.totalorder 1, %s17
      %p256 = scmp.lt.s32.totalorder %s17, 3
      %p257 = pnand %p255, %p256
      %p258 = pneg %p257
      // Predicated region
      $region33: #{tpu_custom_call.1} parent=5 // pred_check
        _
      $region34: #{tpu_custom_call.1} parent=5 // pred_check_branch
        %260 = sbr.rel (%p257) target = $region36
      $region35: #{tpu_custom_call.1} parent=5 // pred_region
        %s261 = ssub.s32 %s17, 1
        %s262 = sand.u32 %s51, 1
        %s263 = scalar_lea.sflag [#allocation4], %s262
        %s264 = sand.u32 %s51, 1
        %s265 = smul.addr %s264, 8
        %s266 = scalar_lea.vmem [#allocation3], %s265
        // Predicated region
        $region37: #{tpu_custom_call.1} parent=35 // pred_check
          %p267 = pneg %p64
        $region38: #{tpu_custom_call.1} parent=35 // pred_check_branch
          %269 = sbr.rel (%p267) target = $region40
        $region39: #{tpu_custom_call.1} parent=35 // pred_region
          %270 = dma.done %s263, 128
        $region40: #{tpu_custom_call.1} parent=35 // pred_fallthru
          _
        // Predicated region
        $region41: #{tpu_custom_call.1} parent=35 // pred_check
          %p271 = pneg %p90
        $region42: #{tpu_custom_call.1} parent=35 // pred_check_branch
          %273 = sbr.rel (%p271) target = $region44
        $region43: #{tpu_custom_call.1} parent=35 // pred_region
          %274 = dma.done [#allocation7], 128
        $region44: #{tpu_custom_call.1} parent=35 // pred_fallthru
          _
        // Predicated region
        $region45: #{tpu_custom_call.1} parent=35 // pred_check
          %p275 = pneg %p118
        $region46: #{tpu_custom_call.1} parent=35 // pred_check_branch
          %277 = sbr.rel (%p275) target = $region48
        $region47: #{tpu_custom_call.1} parent=35 // pred_region
          %278 = dma.done [#allocation7], 2048
        $region48: #{tpu_custom_call.1} parent=35 // pred_fallthru
          _
        %s279 = sand.u32 %s51, 1
        %s280 = scalar_lea.sflag [#allocation4], %s279
        %s281 = sand.u32 %s51, 1
        %s282 = smul.addr %s281, 8
        %s283 = scalar_lea.vmem [#allocation3], %s282
        %p284 = pneg %p64
        %p285 = pneg %p61
        %p286 = pneg %p90
        %p287 = pneg %p87
        %p288 = pneg %p118
        %p289 = pneg %p115
        %s290 = smul.u32 2, %s28
        %p291 = scmp.lt.s32.totalorder %s290, 1
        %s292 = scalar_select %p291, %s290, 1
        %s293 = scalar_lea.vmem %s3, %s292
        %p294 = pneg %p144
        %p295 = pneg %p141
        %p296 = pneg %p172
        %p297 = pneg %p169
        %s298 = sand.u32 %s159, 1
        %s299 = scalar_lea.sflag [#allocation5], %s298
        %s300 = sand.u32 %s159, 1
        %s301 = smul.addr %s300, 32
        %s302 = scalar_lea.vmem [#allocation9], %s301
        %s303 = smul.u32 2, %s27
        %s304 = smul.u32 16, %s29
        %s305 = smul.u32 2, %s28
        %s306 = smul.u32 2, %s28
        %p307 = scmp.lt.s32.totalorder %s306, 1
        %s308 = scalar_select %p307, %s306, 1
        %s309 = scalar_lea.vmem %s3, %s308
        %s310 = smul.u32 2, %s28
        %s311 = smul.u32 2, %s27
        %s312 = smul.u32 2, %s28
        %p314 = scmp.eq.s32.totalorder %s29, 0
        // Predicated region
        $region49: #{tpu_custom_call.1} parent=35 // pred_check
          %p315 = pneg %p314
        $region50: #{tpu_custom_call.1} parent=35 // pred_check_branch
          %317 = sbr.rel (%p315) target = $region52
        $region51: #{tpu_custom_call.1} parent=35 // pred_region
          %318 = vst [vmem:[#allocation2] sm:$0xff] 0.0
          %319 = vst [vmem:[#allocation2 + $0x8] sm:$0xff] 0.0
          %320 = vst [vmem:[#allocation2 + $0x10] sm:$0xff] 0.0
          %321 = vst [vmem:[#allocation2 + $0x18] sm:$0xff] 0.0
        $region52: #{tpu_custom_call.1} parent=35 // pred_fallthru
          _
        %v322 = vld [vmem:[%s266] sm:$0xf]
        %v323 = vld [vmem:[%s266 + $0x4] sm:$0xf]
        %v324 = vld [vmem:[#allocation6] sm:$0xf]
        %v325 = vld [vmem:[#allocation6 + $0x4] sm:$0xf]
        %v326 = vmul.bf16 %v322, %v324
        %v327 = vmul.bf16 %v323, %v325
        %v328 = vld [vmem:[#allocation2] sm:$0xff]
        %v329 = vld [vmem:[#allocation2 + $0x8] sm:$0xff]
        %v330 = vld [vmem:[#allocation2 + $0x10] sm:$0xff]
        %v331 = vld [vmem:[#allocation2 + $0x18] sm:$0xff]
        %v332 = vld [vmem:[#allocation8] sm:$0xff]
        %v333 = vld [vmem:[#allocation8 + $0x8] sm:$0xff]
        %v334 = vld [vmem:[#allocation8 + $0x10] sm:$0xff]
        %v335 = vld [vmem:[#allocation8 + $0x18] sm:$0xff]
        %v336 = vld [vmem:[#allocation8 + $0x20] sm:$0xff]
        %v337 = vld [vmem:[#allocation8 + $0x28] sm:$0xff]
        %v338 = vld [vmem:[#allocation8 + $0x30] sm:$0xff]
        %v339 = vld [vmem:[#allocation8 + $0x38] sm:$0xff]
        %v340 = vld [vmem:[#allocation8 + $0x40] sm:$0xff]
        %v341 = vld [vmem:[#allocation8 + $0x48] sm:$0xff]
        %v342 = vld [vmem:[#allocation8 + $0x50] sm:$0xff]
        %v343 = vld [vmem:[#allocation8 + $0x58] sm:$0xff]
        %v344 = vld [vmem:[#allocation8 + $0x60] sm:$0xff]
        %v345 = vld [vmem:[#allocation8 + $0x68] sm:$0xff]
        %v346 = vld [vmem:[#allocation8 + $0x70] sm:$0xff]
        %v347 = vld [vmem:[#allocation8 + $0x78] sm:$0xff]
        %v350 = vunpack.c.l.b16 %v326
        %v351 = vunpack.c.l.b16 %v327
        %v352 = vpack.c.b16 %v351, %v350
        %v370 = vunpack.c.l.b16 %v332
        %v371 = vunpack.c.h.b16 %v332
        %v372 = vunpack.c.l.b16 %v333
        %v373 = vunpack.c.h.b16 %v333
        %v374 = vunpack.c.l.b16 %v334
        %v375 = vunpack.c.h.b16 %v334
        %v376 = vunpack.c.l.b16 %v335
        %v377 = vunpack.c.h.b16 %v335
        %v378 = vunpack.c.l.b16 %v336
        %v379 = vunpack.c.h.b16 %v336
        %v380 = vunpack.c.l.b16 %v337
        %v381 = vunpack.c.h.b16 %v337
        %v382 = vunpack.c.l.b16 %v338
        %v383 = vunpack.c.h.b16 %v338
        %v384 = vunpack.c.l.b16 %v339
        %v385 = vunpack.c.h.b16 %v339
        %v386 = vunpack.c.l.b16 %v340
        %v387 = vunpack.c.h.b16 %v340
        %v388 = vunpack.c.l.b16 %v341
        %v389 = vunpack.c.h.b16 %v341
        %v390 = vunpack.c.l.b16 %v342
        %v391 = vunpack.c.h.b16 %v342
        %v392 = vunpack.c.l.b16 %v343
        %v393 = vunpack.c.h.b16 %v343
        %v394 = vunpack.c.l.b16 %v344
        %v395 = vunpack.c.h.b16 %v344
        %v396 = vunpack.c.l.b16 %v345
        %v397 = vunpack.c.h.b16 %v345
        %v398 = vunpack.c.l.b16 %v346
        %v399 = vunpack.c.h.b16 %v346
        %v400 = vunpack.c.l.b16 %v347
        %v401 = vunpack.c.h.b16 %v347
        %v402 = vpack.c.b16 %v372, %v370
        %v403 = vpack.c.b16 %v373, %v371
        %v404 = vpack.c.b16 %v376, %v374
        %v405 = vpack.c.b16 %v377, %v375
        %v406 = vpack.c.b16 %v380, %v378
        %v407 = vpack.c.b16 %v381, %v379
        %v408 = vpack.c.b16 %v384, %v382
        %v409 = vpack.c.b16 %v385, %v383
        %v410 = vpack.c.b16 %v388, %v386
        %v411 = vpack.c.b16 %v389, %v387
        %v412 = vpack.c.b16 %v392, %v390
        %v413 = vpack.c.b16 %v393, %v391
        %v414 = vpack.c.b16 %v396, %v394
        %v415 = vpack.c.b16 %v397, %v395
        %v416 = vpack.c.b16 %v400, %v398
        %v417 = vpack.c.b16 %v401, %v399
        %434 = vmatprep.subr.bf16.mxu0 %v417
        %435 = vmatpush1.bf16.msra.mxu0 %v416
        %436 = vmatprep.subr.bf16.mxu0 %v415
        %437 = vmatpush1.bf16.msra.mxu0 %v414
        %438 = vmatprep.subr.bf16.mxu0 %v413
        %439 = vmatpush1.bf16.msra.mxu0 %v412
        %440 = vmatprep.subr.bf16.mxu0 %v411
        %441 = vmatpush1.bf16.msra.mxu0 %v410
        %442 = vmatprep.subr.bf16.mxu0 %v409
        %443 = vmatpush1.bf16.msra.mxu0 %v408
        %444 = vmatprep.subr.bf16.mxu0 %v407
        %445 = vmatpush1.bf16.msra.mxu0 %v406
        %446 = vmatprep.subr.bf16.mxu0 %v405
        %447 = vmatpush1.bf16.msra.mxu0 %v404
        %448 = vmatprep.subr.bf16.mxu0 %v403
        %449 = vmatpush1.bf16.msra.mxu0 %v402
        %450 = vmatprep.subr.bf16.mxu0 0
        %451 = vmatpush2.bf16.msra.mxu0 0
        %452 = vmatprep.subr.bf16.mxu0 0
        %453 = vmatpush2.bf16.msra.mxu0 0
        %454 = vmatprep.subr.bf16.mxu0 0
        %455 = vmatpush2.bf16.msra.mxu0 0
        %456 = vmatprep.subr.bf16.mxu0 0
        %457 = vmatpush2.bf16.msra.mxu0 0
        %458 = vmatprep.subr.bf16.mxu0 0
        %459 = vmatpush2.bf16.msra.mxu0 0
        %460 = vmatprep.subr.bf16.mxu0 0
        %461 = vmatpush2.bf16.msra.mxu0 0
        %462 = vmatprep.subr.bf16.mxu0 0
        %463 = vmatpush2.bf16.msra.mxu0 0
        %464 = vmatprep.subr.bf16.mxu0 0
        %465 = vmatpush2.bf16.msra.mxu0 0
        %466 = vmatprep.mubr.bf16.mxu0 0
        %467 = vmatmul.mubr.bf16.gmra.mxu0 %v352
        %v468 = vpop.f32.mrf.mxu0
        %v469 = vadd.f32 0.0, %v468
        %v470 = vpop.f32.mrf.mxu0
        %v471 = vadd.f32 0.0, %v470
        %v472 = vpop.f32.mrf.mxu0
        %v473 = vadd.f32 0.0, %v472
        %v474 = vpop.f32.mrf.mxu0
        %v475 = vadd.f32 0.0, %v474
        %476 = vdwg.mxu0
        %v477 = vadd.f32 %v328, %v469
        %v478 = vadd.f32 %v329, %v471
        %v479 = vadd.f32 %v330, %v473
        %v480 = vadd.f32 %v331, %v475
        %481 = vst [vmem:[#allocation2] sm:$0xff] %v477
        %482 = vst [vmem:[#allocation2 + $0x8] sm:$0xff] %v478
        %483 = vst [vmem:[#allocation2 + $0x10] sm:$0xff] %v479
        %484 = vst [vmem:[#allocation2 + $0x18] sm:$0xff] %v480
        // Predicated region
        $region53: #{tpu_custom_call.1} parent=35 // pred_check
          %p485 = pneg %p314
        $region54: #{tpu_custom_call.1} parent=35 // pred_check_branch
          %487 = sbr.rel (%p485) target = $region56
        $region55: #{tpu_custom_call.1} parent=35 // pred_region
          %v488 = vld [vmem:[#allocation2] sm:$0xff]
          %v489 = vld [vmem:[#allocation2 + $0x8] sm:$0xff]
          %v490 = vld [vmem:[#allocation2 + $0x10] sm:$0xff]
          %v491 = vld [vmem:[#allocation2 + $0x18] sm:$0xff]
          %v492 = vld [vmem:[%s309] sm:$0x3]
          %v494 = vlaneseq
          %v495 = vshrl.u32 %v494, 7
          %v496 = vsub.s32 0, %v495
          %v497 = vrot.slane %v492, %v496
          %v498 = vlaneseq
          %v499 = vshrl.u32 %v498, 7
          %v500 = vsub.s32 1, %v499
          %v501 = vrot.slane %v492, %v500
          %v504 = vadd.f32 %v488, %v497
          %v505 = vadd.f32 %v489, %v501
          %v506 = vadd.f32 %v490, %v497
          %v507 = vadd.f32 %v491, %v501
          %508 = vst [vmem:[%s302] sm:$0xff] %v504
          %509 = vst [vmem:[%s302 + $0x8] sm:$0xff] %v505
          %510 = vst [vmem:[%s302 + $0x10] sm:$0xff] %v506
          %511 = vst [vmem:[%s302 + $0x18] sm:$0xff] %v507
        $region56: #{tpu_custom_call.1} parent=35 // pred_fallthru
          _
        %s512 = sand.u32 %s159, 1
        %s513 = scalar_lea.sflag [#allocation5], %s512
        %s514 = sand.u32 %s159, 1
        %s515 = smul.addr %s514, 32
        %s516 = scalar_lea.vmem [#allocation9], %s515
        // Predicated region
        $region57: #{tpu_custom_call.1} parent=35 // pred_check
          %p517 = pneg %p169
        $region58: #{tpu_custom_call.1} parent=35 // pred_check_branch
          %519 = sbr.rel (%p517) target = $region60
        $region59: #{tpu_custom_call.1} parent=35 // pred_region
          %s520 = smul.u32 2, %s27
          %s521 = smul.u32 2, %s28
          %s523 = ssub.s32 512, 512
          %524 = vsyncadd %s513, %s523
          %s525 = smul.addr %s520, 2
          %s526 = sadd.s32 %s521, %s525
          %s527 = smul.addr %s526, 128
          %s528 = scalar_lea.hbm %s4, %s527
          %s529 = sshll.u32 %s516, 4
          %s530 = int_to_ptr.vmem [resolvable:$true] %s529
          %535 = dma.vmem_to_hbm [thread:$0]  %s530, 512, %s528, %s513, 256, 256, 16
        $region60: #{tpu_custom_call.1} parent=35 // pred_fallthru
          _
      $region36: #{tpu_custom_call.1} parent=5 // pred_fallthru
        _
      %p536 = scmp.le.s32.totalorder 2, %s17
      // Predicated region
      $region61: #{tpu_custom_call.1} parent=5 // pred_check
        %p537 = pneg %p536
      $region62: #{tpu_custom_call.1} parent=5 // pred_check_branch
        %539 = sbr.rel (%p537) target = $region64
      $region63: #{tpu_custom_call.1} parent=5 // pred_region
        %s540 = ssub.s32 %s17, 2
        // Predicated region
        $region65: #{tpu_custom_call.1} parent=63 // pred_check
          %p541 = pneg %p175
        $region66: #{tpu_custom_call.1} parent=63 // pred_check_branch
          %543 = sbr.rel (%p541) target = $region68
        $region67: #{tpu_custom_call.1} parent=63 // pred_region
          %s544 = sand.u32 %s160, 1
          %s545 = scalar_lea.sflag [#allocation5], %s544
          %s546 = sand.u32 %s160, 1
          %s547 = smul.addr %s546, 32
          %s548 = scalar_lea.vmem [#allocation9], %s547
          %549 = dma.done %s545, 512
        $region68: #{tpu_custom_call.1} parent=63 // pred_fallthru
          _
      $region64: #{tpu_custom_call.1} parent=5 // pred_fallthru
        _
    $region6: #{tpu_custom_call.1} parent=1 // loop_footer
      %s21 = sadd.s32 1, %s17
    $region7: #{tpu_custom_call.1} parent=1 // loop_footer_branch
      %16 = sbr.rel target = $region3
    $region8: #{tpu_custom_call.1} parent=1 // loop_exit
      _
    %550 = vsyncpa [#allocation4], 1
    %s551 = scalar_lea.sflag [#allocation4], 1
    %552 = vsyncpa %s551, 1
    %553 = vsyncpa [#allocation7], 1
    %554 = vsyncpa [#allocation5], 1
    %s555 = scalar_lea.sflag [#allocation5], 1
    %556 = vsyncpa %s555, 1

</llo_original>
